<compile_context>
chip_gen: v7x
topology: tpu7x:2x2x1
jax: 0.10.0
libtpu: 0.0.40
codegen_flags: <defaults>
</compile_context>

<pallas_src>
import jax
import jax.numpy as jnp
from jax.experimental import pallas as pl
from jax.experimental.pallas import tpu as pltpu


# ------------------------------ helpers ----------------------------------- #
def _round_up(x, m):
    return (x + m - 1) // m * m


# ----------------------------- Pallas kernel ------------------------------ #
def _pooler_dense_kernel(x_ref, w_ref, b_ref, o_ref):
    """y = x @ w + b.

    x_ref : (TM, K)  bf16
    w_ref : (K,  Np) bf16   (resident across the M grid)
    b_ref : (1,  Np) f32
    o_ref : (TM, Np) f32
    """
    acc = jnp.dot(x_ref[...], w_ref[...], preferred_element_type=jnp.float32)
    o_ref[...] = (acc + b_ref[...]).astype(o_ref.dtype)


def pooler_dense(x2d, w_pad_bf16, b_pad_f32, n_out):
    """Apply the linear layer via pallas_call.

    x2d         : (M, K)  f32 (cast to bf16 here — halves dominant HBM traffic)
    w_pad_bf16  : (K, Np) bf16, Np multiple of 128 (zero-padded past n_out)
    b_pad_f32   : (Np,)   f32  (zero-padded past n_out)
    returns (M, n_out) f32
    """
    M, K = x2d.shape
    Kw, Np = w_pad_bf16.shape
    assert K == Kw and Np % 128 == 0

    # Row tile: multiple of 128 (satisfies bf16 sublane + f32 (8,128) rules),
    # capped at 512 to stay inside the v7x 64 MiB VMEM budget.
    TM = min(512, _round_up(max(M, 1), 128))
    M_pad = _round_up(M, TM)
    grid_m = M_pad // TM

    x = x2d.astype(jnp.bfloat16)
    if M_pad != M:
        x = jnp.pad(x, ((0, M_pad - M), (0, 0)))
    b2d = b_pad_f32.reshape(1, Np)

    # VMEM budget: double-buffered x + out, (double-buffered) resident w + bias.
    vmem_needed = (2 * TM * K * 2) + (2 * K * Np * 2) + (2 * TM * Np * 4) + (2 * Np * 4)
    vmem_limit = int(min(max(vmem_needed * 2, 16 * 1024 * 1024), 56 * 1024 * 1024))

    out_pad = pl.pallas_call(
        _pooler_dense_kernel,
        out_shape=jax.ShapeDtypeStruct((M_pad, Np), jnp.float32),
        grid_spec=pl.GridSpec(
            grid=(grid_m,),
            in_specs=[
                pl.BlockSpec((TM, K), lambda i: (i, 0)),   # x: tiled over M
                pl.BlockSpec((K, Np), lambda i: (0, 0)),   # w: VMEM-resident
                pl.BlockSpec((1, Np), lambda i: (0, 0)),   # b: VMEM-resident
            ],
            out_specs=pl.BlockSpec((TM, Np), lambda i: (i, 0)),
        ),
        compiler_params=pltpu.CompilerParams(
            dimension_semantics=("parallel",),   # shard M tiles across v7x's 2 TCs
            vmem_limit_bytes=vmem_limit,
        ),
        cost_estimate=pl.CostEstimate(
            flops=2 * M_pad * K * Np,
            bytes_accessed=2 * M_pad * K + 2 * K * Np + 4 * M_pad * Np + 4 * Np,
            transcendentals=0,
        ),
    )(x, w_pad_bf16, b2d)

    return out_pad[:M, :n_out]


# ----------------------------- Pooler module ------------------------------ #
class PoolerPallas:
    """JAX/Pallas port of the PyTorch Pooler module."""

    def __init__(self, dim_in, dim_out, tied=True, key=None):
        if key is None:
            key = jax.random.PRNGKey(0)
        kq_w, kq_b, kd_w, kd_b = jax.random.split(key, 4)
        bound = 1.0 / float(dim_in) ** 0.5  # matches nn.Linear default init range

        self.dim_in = dim_in
        self.dim_out = dim_out

        # master weights in f32, stored pre-transposed: (dim_in, dim_out)
        self.wq = jax.random.uniform(kq_w, (dim_in, dim_out), jnp.float32, -bound, bound)
        self.bq = jax.random.uniform(kq_b, (dim_out,), jnp.float32, -bound, bound)
        if tied:
            self.wd, self.bd = self.wq, self.bq
        else:
            self.wd = jax.random.uniform(kd_w, (dim_in, dim_out), jnp.float32, -bound, bound)
            self.bd = jax.random.uniform(kd_b, (dim_out,), jnp.float32, -bound, bound)

        # kernel-side copies: N padded to 128 lanes, weights cast to bf16
        self._n_pad = _round_up(dim_out, 128)
        self._wq_k = self._pad_w(self.wq)
        self._bq_k = self._pad_b(self.bq)
        if tied:
            self._wd_k, self._bd_k = self._wq_k, self._bq_k
        else:
            self._wd_k = self._pad_w(self.wd)
            self._bd_k = self._pad_b(self.bd)

    def _pad_w(self, w):
        return jnp.pad(w, ((0, 0), (0, self._n_pad - self.dim_out))).astype(jnp.bfloat16)

    def _pad_b(self, b):
        return jnp.pad(b, (0, self._n_pad - self.dim_out)).astype(jnp.float32)

    def __call__(self, hidden_states, d=False):
        w, b = (self._wd_k, self._bd_k) if d else (self._wq_k, self._bq_k)
        orig_shape = hidden_states.shape
        x2d = hidden_states.reshape(-1, orig_shape[-1])
        y2d = pooler_dense(x2d, w, b, self.dim_out)
        return y2d.reshape(*orig_shape[:-1], self.dim_out)


# --------------------------------- main ----------------------------------- #
if __name__ == "__main__":
    batch, seq, dim_in, dim_out = 2, 8, 32, 32

    key = jax.random.PRNGKey(0)
    k_x, k_params = jax.random.split(key)
    hidden_states = jax.random.normal(k_x, (batch, seq, dim_in), jnp.float32)

    pooler = PoolerPallas(dim_in, dim_out, tied=True, key=k_params)

    # q-side (d=False) and d-side (d=True, tied -> same weights)
    out_q = pooler(hidden_states, d=False)
    out_d = pooler(hidden_states, d=True)
    jax.block_until_ready((out_q, out_d))

    assert out_q.shape == (batch, seq, dim_out)

    x2d = hidden_states.reshape(-1, dim_in)

    # reference with the same bf16-input / f32-accumulate arithmetic as the kernel
    ref_bf16 = (
        jnp.dot(x2d.astype(jnp.bfloat16), pooler.wq.astype(jnp.bfloat16),
                preferred_element_type=jnp.float32) + pooler.bq
    ).reshape(batch, seq, dim_out)
    assert jnp.allclose(out_q, ref_bf16, atol=1e-3, rtol=1e-3)

    # sanity check against the full-f32 reference (bf16 rounding tolerance)
    ref_f32 = (x2d @ pooler.wq + pooler.bq).reshape(batch, seq, dim_out)
    assert jnp.allclose(out_q, ref_f32, atol=3e-2, rtol=3e-2)

    # tied pooler -> identical outputs
    assert jnp.array_equal(out_q, out_d)

    print("KERNEL_OK")
</pallas_src>

<mosaic_0001>
module attributes {stable_mosaic.version = 11 : i64} {
  func.func @_pooler_dense_kernel(%arg0: i32, %arg1: memref<128x32xbf16, #tpu.memory_space<vmem>>, %arg2: memref<32x128xbf16, #tpu.memory_space<vmem>>, %arg3: memref<1x128xf32, #tpu.memory_space<vmem>>, %arg4: memref<128x128xf32, #tpu.memory_space<vmem>>) attributes {dimension_semantics = [#tpu.dimension_semantics<parallel>], iteration_bounds = array<i64: 1>, scalar_prefetch = 0 : i64, scratch_operands = 0 : i64, tpu.core_type = #tpu.core_type<tc>, window_params = [{transform_indices = @transform_0, window_bounds = array<i64: 128, 32>}, {pipeline_mode = #tpu.pipeline_mode<synchronous>, transform_indices = @transform_1, window_bounds = array<i64: 32, 128>}, {pipeline_mode = #tpu.pipeline_mode<synchronous>, transform_indices = @transform_2, window_bounds = array<i64: 1, 128>}, {transform_indices = @transform_3, window_bounds = array<i64: 128, 128>}]} {
    %c0 = arith.constant 0 : index
    %c0_0 = arith.constant 0 : index
    %0 = vector.load %arg1[%c0, %c0_0] : memref<128x32xbf16, #tpu.memory_space<vmem>>, vector<128x32xbf16>
    %c0_1 = arith.constant 0 : index
    %c0_2 = arith.constant 0 : index
    %1 = vector.load %arg2[%c0_1, %c0_2] : memref<32x128xbf16, #tpu.memory_space<vmem>>, vector<32x128xbf16>
    %cst = arith.constant dense<0.000000e+00> : vector<128x128xf32>
    %2 = tpu.matmul %0, %1, %cst {dimension_numbers = #tpu.dot_dimension_numbers<[1], [0], [0], [1], [0, 0, 1, 1], [], []>} : vector<128x32xbf16>, vector<32x128xbf16>, vector<128x128xf32> -> vector<128x128xf32>
    %c0_3 = arith.constant 0 : index
    %c0_4 = arith.constant 0 : index
    %3 = vector.load %arg3[%c0_3, %c0_4] : memref<1x128xf32, #tpu.memory_space<vmem>>, vector<1x128xf32>
    %4 = vector.broadcast %3 : vector<1x128xf32> to vector<128x128xf32>
    %5 = arith.addf %2, %4 : vector<128x128xf32>
    %c0_5 = arith.constant 0 : index
    %c0_6 = arith.constant 0 : index
    %6 = vector.load %arg4[%c0_5, %c0_6] : memref<128x128xf32, #tpu.memory_space<vmem>>, vector<128x128xf32>
    tpu.vector_store %arg4[%c0_5, %c0_6], %5 {strides = array<i32>} : memref<128x128xf32, #tpu.memory_space<vmem>>, vector<128x128xf32>,
    return
  }
  func.func @transform_0(%arg0: i32) -> (i32, i32) {
    %c0_i32 = arith.constant 0 : i32
    %c0_i32_0 = arith.constant 0 : i32
    return %arg0, %c0_i32 : i32, i32
  }
  func.func @transform_1(%arg0: i32) -> (i32, i32) {
    %c0_i32 = arith.constant 0 : i32
    %c0_i32_0 = arith.constant 0 : i32
    %c0_i32_1 = arith.constant 0 : i32
    return %c0_i32, %c0_i32_0 : i32, i32
  }
  func.func @transform_2(%arg0: i32) -> (i32, i32) {
    %c0_i32 = arith.constant 0 : i32
    %c0_i32_0 = arith.constant 0 : i32
    %c0_i32_1 = arith.constant 0 : i32
    return %c0_i32, %c0_i32_0 : i32, i32
  }
  func.func @transform_3(%arg0: i32) -> (i32, i32) {
    %c0_i32 = arith.constant 0 : i32
    %c0_i32_0 = arith.constant 0 : i32
    return %arg0, %c0_i32 : i32, i32
  }
}

</mosaic_0001>

<llo_original>
// kernel: tpu_custom_call.1
$region0: #{tpu_custom_call.1}
  #allocation0 [shape = 'u32[]', space=smem, size = 0x4, offset = 0x4, fixed_abs, tag = 'smem constant byte address 0x4 - core index']
  #allocation1 [shape = 'u32[144,128]{1,0:T(1,128)}', space=vmem, size = 0x12000, scoped, tag = 'internal scratch']
  %s0 = inlined_call_operand.vmem [shape: bf16[128,32], index: 0, kind: input, shape index: {}]
  %s1 = inlined_call_operand.vmem [shape: bf16[32,128], index: 1, kind: input, shape index: {}]
  %s2 = inlined_call_operand.vmem [shape: f32[1,128], index: 2, kind: input, shape index: {}]
  %s3 = inlined_call_operand.hbm [shape: f32[128,128], index: 3, kind: output, shape index: {}]
  %s4 = sld [smem:[#allocation0]]
  $region22: #{tpu_custom_call.1} parent=0
    _
  %s6 = ssub.s32 1, %s4
  %s7 = scalar_select 0, %s6, %s4
  $region1: #{tpu_custom_call.1} parent=0
    #allocation2 [shape = 'u8[65536]{0}', space=vmem, size = 0x10000, scoped, tag = 'output window, operand 0, single buffered']
    #allocation3 [shape = 's32[1]{0}', space=sflag, size = 0x4, scoped, tag = 'scoped memory for tpu_custom_call.1']
    %8 = vsyncpa [#allocation3], 0
    // Predicated region
    $region2: #{tpu_custom_call.1} parent=1 // pred_check
      _
    $region3: #{tpu_custom_call.1} parent=1 // pred_check_branch
      %10 = sbr.rel (0) target = $region5
    $region4: #{tpu_custom_call.1} parent=1 // pred_region
      _
    $region5: #{tpu_custom_call.1} parent=1 // pred_fallthru
      _
    // Predicated region
    $region6: #{tpu_custom_call.1} parent=1 // pred_check
      _
    $region7: #{tpu_custom_call.1} parent=1 // pred_check_branch
      %12 = sbr.rel (0) target = $region9
    $region8: #{tpu_custom_call.1} parent=1 // pred_region
      _
    $region9: #{tpu_custom_call.1} parent=1 // pred_fallthru
      _
    // Predicated region
    $region10: #{tpu_custom_call.1} parent=1 // pred_check
      _
    $region11: #{tpu_custom_call.1} parent=1 // pred_check_branch
      %14 = sbr.rel (0) target = $region13
    $region12: #{tpu_custom_call.1} parent=1 // pred_region
      _
    $region13: #{tpu_custom_call.1} parent=1 // pred_fallthru
      _
    %v16 = vld [vmem:[%s0] sm:$0xf]
    %v17 = vld [vmem:[%s0 + $0x4] sm:$0xf]
    %v18 = vld [vmem:[%s0 + $0x8] sm:$0xf]
    %v19 = vld [vmem:[%s0 + $0xc] sm:$0xf]
    %v20 = vld [vmem:[%s0 + $0x10] sm:$0xf]
    %v21 = vld [vmem:[%s0 + $0x14] sm:$0xf]
    %v22 = vld [vmem:[%s0 + $0x18] sm:$0xf]
    %v23 = vld [vmem:[%s0 + $0x1c] sm:$0xf]
    %v24 = vld [vmem:[%s0 + $0x20] sm:$0xf]
    %v25 = vld [vmem:[%s0 + $0x24] sm:$0xf]
    %v26 = vld [vmem:[%s0 + $0x28] sm:$0xf]
    %v27 = vld [vmem:[%s0 + $0x2c] sm:$0xf]
    %v28 = vld [vmem:[%s0 + $0x30] sm:$0xf]
    %v29 = vld [vmem:[%s0 + $0x34] sm:$0xf]
    %v30 = vld [vmem:[%s0 + $0x38] sm:$0xf]
    %v31 = vld [vmem:[%s0 + $0x3c] sm:$0xf]
    %v32 = vld [vmem:[%s1] sm:$0xf]
    %v33 = vld [vmem:[%s1 + $0x4] sm:$0xf]
    %v34 = vld [vmem:[%s1 + $0x8] sm:$0xf]
    %v35 = vld [vmem:[%s1 + $0xc] sm:$0xf]
    %v36 = vld [vmem:[%s2] sm:$0x1]
    %v38 = vlaneseq
    %v39 = vshrl.u32 %v38, 7
    %v40 = vsub.s32 0, %v39
    %v41 = vrot.slane %v36, %v40
    %v59 = vunpack.c.l.b16 %v16
    %v60 = vunpack.c.l.b16 %v17
    %v61 = vunpack.c.l.b16 %v18
    %v62 = vunpack.c.l.b16 %v19
    %v63 = vunpack.c.l.b16 %v20
    %v64 = vunpack.c.l.b16 %v21
    %v65 = vunpack.c.l.b16 %v22
    %v66 = vunpack.c.l.b16 %v23
    %v67 = vunpack.c.l.b16 %v24
    %v68 = vunpack.c.l.b16 %v25
    %v69 = vunpack.c.l.b16 %v26
    %v70 = vunpack.c.l.b16 %v27
    %v71 = vunpack.c.l.b16 %v28
    %v72 = vunpack.c.l.b16 %v29
    %v73 = vunpack.c.l.b16 %v30
    %v74 = vunpack.c.l.b16 %v31
    %v75 = vpack.c.b16 %v60, %v59
    %v76 = vpack.c.b16 %v62, %v61
    %v77 = vpack.c.b16 %v64, %v63
    %v78 = vpack.c.b16 %v66, %v65
    %v79 = vpack.c.b16 %v68, %v67
    %v80 = vpack.c.b16 %v70, %v69
    %v81 = vpack.c.b16 %v72, %v71
    %v82 = vpack.c.b16 %v74, %v73
    %v87 = vunpack.c.l.b16 %v32
    %v88 = vunpack.c.l.b16 %v33
    %v89 = vunpack.c.l.b16 %v34
    %v90 = vunpack.c.l.b16 %v35
    %v91 = vpack.c.b16 %v88, %v87
    %v92 = vpack.c.b16 %v90, %v89
    %vm95 = vcmask 261120
    %v97 = vsel %vm95, %v75, 0
    %v100 = vsel %vm95, %v76, 0
    %v103 = vsel %vm95, %v77, 0
    %v106 = vsel %vm95, %v78, 0
    %v109 = vsel %vm95, %v79, 0
    %v112 = vsel %vm95, %v80, 0
    %v115 = vsel %vm95, %v81, 0
    %v118 = vsel %vm95, %v82, 0
    %120 = vmatprep.subr.bf16.mxu0 0
    %121 = vmatpush1.bf16.msra.mxu0 %v91
    %122 = vmatprep.subr.bf16.mxu0 0
    %123 = vmatpush1.bf16.msra.mxu0 %v92
    %124 = vmatprep.subr.bf16.mxu0 0
    %125 = vmatpush1.bf16.msra.mxu0 0
    %126 = vmatprep.subr.bf16.mxu0 0
    %127 = vmatpush1.bf16.msra.mxu0 0
    %128 = vmatprep.subr.bf16.mxu0 0
    %129 = vmatpush1.bf16.msra.mxu0 0
    %130 = vmatprep.subr.bf16.mxu0 0
    %131 = vmatpush1.bf16.msra.mxu0 0
    %132 = vmatprep.subr.bf16.mxu0 0
    %133 = vmatpush1.bf16.msra.mxu0 0
    %134 = vmatprep.subr.bf16.mxu0 0
    %135 = vmatpush1.bf16.msra.mxu0 0
    %136 = vmatprep.subr.bf16.mxu0 0
    %137 = vmatpush1.bf16.msra.mxu0 0
    %138 = vmatprep.subr.bf16.mxu0 0
    %139 = vmatpush1.bf16.msra.mxu0 0
    %140 = vmatprep.subr.bf16.mxu0 0
    %141 = vmatpush1.bf16.msra.mxu0 0
    %142 = vmatprep.subr.bf16.mxu0 0
    %143 = vmatpush1.bf16.msra.mxu0 0
    %144 = vmatprep.subr.bf16.mxu0 0
    %145 = vmatpush1.bf16.msra.mxu0 0
    %146 = vmatprep.subr.bf16.mxu0 0
    %147 = vmatpush1.bf16.msra.mxu0 0
    %148 = vmatprep.subr.bf16.mxu0 0
    %149 = vmatpush1.bf16.msra.mxu0 0
    %150 = vmatprep.subr.bf16.mxu0 0
    %151 = vmatpush1.bf16.msra.mxu0 0
    %152 = vmatprep.mubr.bf16.mxu0 0
    %153 = vmatmul.mubr.bf16.gmra.mrb[0].mxu0 %v97
    %v154 = vpop.f32.mrb[0].mxu0
    %v155 = vadd.f32 %v41, %v154
    %v156 = vpop.f32.mrb[0].mxu0
    %v157 = vpop.f32.mrb[0].mxu0
    %v158 = vadd.f32 %v41, %v157
    %v159 = vpop.f32.mrb[0].mxu0
    %160 = vmatprep.mubr.bf16.mxu0 0
    %161 = vmatmul.mubr.bf16.gmra.mrb[0].mxu0 %v100
    %v162 = vpop.f32.mrb[0].mxu0
    %v163 = vadd.f32 %v41, %v162
    %v164 = vpop.f32.mrb[0].mxu0
    %v165 = vpop.f32.mrb[0].mxu0
    %v166 = vadd.f32 %v41, %v165
    %v167 = vpop.f32.mrb[0].mxu0
    %168 = vmatprep.mubr.bf16.mxu0 0
    %169 = vmatmul.mubr.bf16.gmra.mrb[0].mxu0 %v103
    %v170 = vpop.f32.mrb[0].mxu0
    %v171 = vadd.f32 %v41, %v170
    %v172 = vpop.f32.mrb[0].mxu0
    %v173 = vpop.f32.mrb[0].mxu0
    %v174 = vadd.f32 %v41, %v173
    %v175 = vpop.f32.mrb[0].mxu0
    %176 = vmatprep.mubr.bf16.mxu0 0
    %177 = vmatmul.mubr.bf16.gmra.mrb[0].mxu0 %v106
    %v178 = vpop.f32.mrb[0].mxu0
    %v179 = vadd.f32 %v41, %v178
    %v180 = vpop.f32.mrb[0].mxu0
    %v181 = vpop.f32.mrb[0].mxu0
    %v182 = vadd.f32 %v41, %v181
    %v183 = vpop.f32.mrb[0].mxu0
    %184 = vmatprep.mubr.bf16.mxu0 0
    %185 = vmatmul.mubr.bf16.gmra.mrb[0].mxu0 %v109
    %v186 = vpop.f32.mrb[0].mxu0
    %v187 = vadd.f32 %v41, %v186
    %v188 = vpop.f32.mrb[0].mxu0
    %v189 = vpop.f32.mrb[0].mxu0
    %v190 = vadd.f32 %v41, %v189
    %v191 = vpop.f32.mrb[0].mxu0
    %192 = vmatprep.mubr.bf16.mxu0 0
    %193 = vmatmul.mubr.bf16.gmra.mrb[0].mxu0 %v112
    %v194 = vpop.f32.mrb[0].mxu0
    %v195 = vadd.f32 %v41, %v194
    %v196 = vpop.f32.mrb[0].mxu0
    %v197 = vpop.f32.mrb[0].mxu0
    %v198 = vadd.f32 %v41, %v197
    %v199 = vpop.f32.mrb[0].mxu0
    %200 = vmatprep.mubr.bf16.mxu0 0
    %201 = vmatmul.mubr.bf16.gmra.mrb[0].mxu0 %v115
    %v202 = vpop.f32.mrb[0].mxu0
    %v203 = vadd.f32 %v41, %v202
    %v204 = vpop.f32.mrb[0].mxu0
    %v205 = vpop.f32.mrb[0].mxu0
    %v206 = vadd.f32 %v41, %v205
    %v207 = vpop.f32.mrb[0].mxu0
    %208 = vmatprep.mubr.bf16.mxu0 0
    %209 = vmatmul.mubr.bf16.gmra.mrb[0].mxu0 %v118
    %v210 = vpop.f32.mrb[0].mxu0
    %v211 = vadd.f32 %v41, %v210
    %v212 = vpop.f32.mrb[0].mxu0
    %v213 = vpop.f32.mrb[0].mxu0
    %v214 = vadd.f32 %v41, %v213
    %v215 = vpop.f32.mrb[0].mxu0
    %216 = vdwg.mxu0
    %217 = vst [vmem:[#allocation2] sm:$0xff] %v155
    %218 = vst [vmem:[#allocation2 + $0x8] sm:$0xff] %v158
    %219 = vst [vmem:[#allocation2 + $0x10] sm:$0xff] %v163
    %220 = vst [vmem:[#allocation2 + $0x18] sm:$0xff] %v166
    %221 = vst [vmem:[#allocation2 + $0x20] sm:$0xff] %v171
    %222 = vst [vmem:[#allocation2 + $0x28] sm:$0xff] %v174
    %223 = vst [vmem:[#allocation2 + $0x30] sm:$0xff] %v179
    %224 = vst [vmem:[#allocation2 + $0x38] sm:$0xff] %v182
    %225 = vst [vmem:[#allocation2 + $0x40] sm:$0xff] %v187
    %226 = vst [vmem:[#allocation2 + $0x48] sm:$0xff] %v190
    %227 = vst [vmem:[#allocation2 + $0x50] sm:$0xff] %v195
    %228 = vst [vmem:[#allocation2 + $0x58] sm:$0xff] %v198
    %229 = vst [vmem:[#allocation2 + $0x60] sm:$0xff] %v203
    %230 = vst [vmem:[#allocation2 + $0x68] sm:$0xff] %v206
    %231 = vst [vmem:[#allocation2 + $0x70] sm:$0xff] %v211
    %232 = vst [vmem:[#allocation2 + $0x78] sm:$0xff] %v214
    // Predicated region
    $region14: #{tpu_custom_call.1} parent=1 // pred_check
      _
    $region15: #{tpu_custom_call.1} parent=1 // pred_check_branch
      %234 = sbr.rel (0) target = $region17
    $region16: #{tpu_custom_call.1} parent=1 // pred_region
      %s236 = ssub.s32 2048, 2048
      %237 = vsyncadd [#allocation3], %s236
      %s238 = sshll.u32 [#allocation2], 4
      %s239 = int_to_ptr.vmem [resolvable:$true] %s238
      %244 = dma.vmem_to_hbm [thread:$0]  %s239, 2048, %s3, [#allocation3], 128, 128, 8
    $region17: #{tpu_custom_call.1} parent=1 // pred_fallthru
      _
    // Predicated region
    $region18: #{tpu_custom_call.1} parent=1 // pred_check
      _
    $region19: #{tpu_custom_call.1} parent=1 // pred_check_branch
      %246 = sbr.rel (0) target = $region21
    $region20: #{tpu_custom_call.1} parent=1 // pred_region
      %247 = dma.done [#allocation3], 2048
    $region21: #{tpu_custom_call.1} parent=1 // pred_fallthru
      _
    %248 = vsyncpa [#allocation3], 1

</llo_original>
